<compile_context>
chip_gen: v6e
topology: v6e:2x2x1
jax: 0.10.0
libtpu: 0.0.40
codegen_flags: <defaults>
</compile_context>

<pallas_src>
import jax
import jax.numpy as jnp
from jax import lax
from jax.experimental import pallas as pl
from jax.experimental.pallas import tpu as pltpu


def _make_kernel(*, tk, nk, hw_valid, hw_pad, unroll):
    """Builds the kernel with static key-chunking / padding parameters."""

    def kernel(x_ref, xres_ref, w_ref, b_ref, gamma_ref, o_ref,
               q_scr, k_scr, v_scr):
        qi = pl.program_id(1)
        C = o_ref.shape[1]
        TQ = o_ref.shape[2]
        Cqk = q_scr.shape[0]

        # ---- once per batch element: fused q/k/v projection into VMEM scratch ----
        @pl.when(qi == 0)
        def _project():
            x = x_ref[0]                                              # (C, HWp) bf16
            qkv_t = lax.dot_general(
                w_ref[...], x, (((1,), (0,)), ((), ())),
                preferred_element_type=jnp.float32) + b_ref[...]      # (Dqkv, HWp) f32
            v_scr[...] = qkv_t[:C, :].astype(jnp.bfloat16)            # (C, HWp)
            q_scr[...] = qkv_t[C:C + Cqk, :].astype(jnp.bfloat16)     # (Cqk, HWp)
            # k pixel-major: one small, tile-aligned per-batch transpose (f32),
            # so both hot-path matmuls below are plain NN MXU ops.
            k_scr[...] = jnp.transpose(qkv_t[C + Cqk:, :], (1, 0)).astype(jnp.bfloat16)

        # ---- per query tile: key-chunked online softmax ----
        q_start = pl.multiple_of(qi * TQ, TQ)
        q_tile = q_scr[:, pl.ds(q_start, TQ)]                         # (Cqk, TQ) bf16

        def body(kc, carry):
            m, l, acc = carry
            k_start = pl.multiple_of(kc * tk, tk)
            k_chunk = k_scr[pl.ds(k_start, tk), :]                    # (tk, Cqk) bf16
            # s[j, i] = k_j . q_i  (NN; keys on sublanes, queries on lanes)
            s = lax.dot_general(k_chunk, q_tile, (((1,), (0,)), ((), ())),
                                preferred_element_type=jnp.float32)   # (tk, TQ)
            if hw_valid < hw_pad:  # static: only emitted when HW was padded
                kidx = lax.broadcasted_iota(jnp.int32, (tk, TQ), 0) + k_start
                s = jnp.where(kidx < hw_valid, s, -jnp.inf)
            m_new = jnp.maximum(m, jnp.max(s, axis=0, keepdims=True))  # (1, TQ)
            alpha = jnp.exp(m - m_new)                                 # (1, TQ)
            p = jnp.exp(s - m_new)                                     # (tk, TQ)
            l_new = alpha * l + jnp.sum(p, axis=0, keepdims=True)
            v_chunk = v_scr[:, pl.ds(k_start, tk)]                     # (C, tk) bf16
            pv = lax.dot_general(v_chunk, p.astype(jnp.bfloat16),
                                 (((1,), (0,)), ((), ())),
                                 preferred_element_type=jnp.float32)   # (C, TQ)
            return m_new, l_new, alpha * acc + pv

        m0 = jnp.full((1, TQ), -jnp.inf, dtype=jnp.float32)
        l0 = jnp.zeros((1, TQ), dtype=jnp.float32)
        acc0 = jnp.zeros((C, TQ), dtype=jnp.float32)
        _, l, acc = lax.fori_loop(0, nk, body, (m0, l0, acc0), unroll=unroll)

        # Normalize AFTER the AV matmul: a (C, TQ) scale instead of a (TQ, HW) pass.
        out_t = acc * pl.reciprocal(l, approx=True)                    # (C, TQ)
        o_ref[0] = gamma_ref[0] * out_t + xres_ref[0]                  # lane-dense store

    return kernel


def _round_up(n, m):
    return -(-n // m) * m


def self_attention_pallas(x_nchw, wq, bq, wk, bk, wv, bv, gamma):
    """x_nchw: (B, C, H, W) f32; wq/wk: (C, C//8); wv: (C, C). Returns NCHW f32."""
    B, C, H, W = x_nchw.shape
    HW = H * W
    Cqk = wq.shape[1]

    # HW -> multiple of 128 (lane-dense tiles, unmasked stores; padded keys masked);
    # Cqk -> multiple of 8 (sublane-aligned qkv_t slices; zero-pad is exact).
    HWp = _round_up(HW, 128)
    Cqkp = _round_up(Cqk, 8)
    Dqkv = C + 2 * Cqkp

    # Query tile (capped at 256: live (TK,TQ)+(C,TQ) set stays modest on v7x's
    # 64 MiB VMEM) and key chunk for the online softmax.
    TQ = 256 if (HWp % 256 == 0 and HWp >= 512) else 128
    NQ = HWp // TQ
    TK = next(t for t in (512, 256, 128) if HWp % t == 0)
    NK = HWp // TK
    unroll = 2 if (NK >= 2 and NK % 2 == 0) else 1

    # NCHW used natively as (B, C, HW): reshape only, no transposes in/out.
    x_flat = x_nchw.reshape(B, C, HW)
    if HWp != HW:
        x_flat = jnp.pad(x_flat, ((0, 0), (0, 0), (0, HWp - HW)))
    x_bf16 = x_flat.astype(jnp.bfloat16)        # projection operand (half HBM/VMEM)
    x_res = x_flat.astype(jnp.float32)          # exact f32 residual, tiled per q-tile

    # Fused projection weight (out_ch, in_ch), ordered [v | q | k]; q/k zero-padded
    # to Cqkp columns so every slice of qkv_t starts on a sublane multiple of 8.
    pad_qk = ((0, 0), (0, Cqkp - Cqk))
    w_qkv_t = jnp.concatenate(
        [wv.T, jnp.pad(wq, pad_qk).T, jnp.pad(wk, pad_qk).T], axis=0
    ).astype(jnp.bfloat16)                                              # (Dqkv, C)
    b_qkv = jnp.concatenate(
        [bv, jnp.pad(bq, (0, Cqkp - Cqk)), jnp.pad(bk, (0, Cqkp - Cqk))], axis=0
    ).reshape(Dqkv, 1).astype(jnp.float32)
    gamma1 = gamma.reshape(1).astype(jnp.float32)

    kernel = _make_kernel(tk=TK, nk=NK, hw_valid=HW, hw_pad=HWp, unroll=unroll)

    # Generation-aware VMEM budget (v7x: 64 MiB physical; v5e/v6e: 128 MiB).
    need = (2 * C * HWp * 2                         # bf16 x full-image block (dbl-buf)
            + 2 * C * TQ * 4 + 2 * C * TQ * 4       # f32 residual in + f32 out (dbl-buf)
            + 2 * Dqkv * C * 2 + 2 * Dqkv * 128 * 4  # weights + lane-padded bias
            + (Cqkp * HWp + HWp * max(Cqkp, 128) + C * HWp) * 2  # q/k/v scratch
            + Dqkv * HWp * 4                        # f32 projection temporary
            + 2 * TK * TQ * 4 + 2 * C * TQ * 4)     # live softmax chunk + accumulator
    try:
        phys = int(getattr(pltpu.get_tpu_info(), "vmem_capacity_bytes",
                           128 * 1024 * 1024))
    except Exception:
        phys = 128 * 1024 * 1024
    vmem_limit = int(min(0.9 * phys, max(1.5 * need, 32 * 1024 * 1024)))

    flops = (2 * B * Dqkv * C * HWp            # fused projection
             + 2 * B * HWp * HWp * Cqkp        # scores
             + 2 * B * HWp * HWp * C)          # attention-weighted values
    cost = pl.CostEstimate(
        flops=int(flops),
        transcendentals=int(B * HWp * HWp),
        bytes_accessed=int(B * C * HWp * (2 + 4 + 4) + Dqkv * C * 2 + Dqkv * 4 + 4))

    grid_spec = pltpu.PrefetchScalarGridSpec(
        num_scalar_prefetch=0,
        grid=(B, NQ),
        in_specs=[
            pl.BlockSpec((1, C, HWp), lambda b, q: (b, 0, 0)),   # bf16 x, full image / b
            pl.BlockSpec((1, C, TQ), lambda b, q: (b, 0, q)),    # f32 x residual tile
            pl.BlockSpec((Dqkv, C), lambda b, q: (0, 0)),        # fused qkv weights bf16
            pl.BlockSpec((Dqkv, 1), lambda b, q: (0, 0)),        # fused biases f32
            pl.BlockSpec(memory_space=pltpu.MemorySpace.SMEM),   # gamma scalar
        ],
        out_specs=pl.BlockSpec((1, C, TQ), lambda b, q: (b, 0, q)),
        scratch_shapes=[
            pltpu.VMEM((Cqkp, HWp), jnp.bfloat16),   # q  (channel-major)
            pltpu.VMEM((HWp, Cqkp), jnp.bfloat16),   # k  (pixel-major)
            pltpu.VMEM((C, HWp), jnp.bfloat16),      # v  (channel-major)
        ],
    )

    out_flat = pl.pallas_call(
        kernel,
        out_shape=jax.ShapeDtypeStruct((B, C, HWp), jnp.float32),
        grid_spec=grid_spec,
        compiler_params=pltpu.CompilerParams(
            # Query-tile axis must stay "arbitrary": scratch is filled at qi==0
            # and reused by later tiles of the same batch element.
            dimension_semantics=("parallel", "arbitrary"),
            vmem_limit_bytes=vmem_limit),
        cost_estimate=cost,
    )(x_bf16, x_res, w_qkv_t, b_qkv, gamma1)

    if HWp != HW:
        out_flat = out_flat[:, :, :HW]
    return out_flat.reshape(B, C, H, W)


def self_attention_ref(x_nchw, wq, bq, wk, bk, wv, bv, gamma):
    """Pure-JAX f32 reference mirroring the PyTorch forward exactly."""
    B, C, H, W = x_nchw.shape
    HW = H * W
    x_cl = jnp.transpose(x_nchw, (0, 2, 3, 1)).reshape(B, HW, C)
    q = x_cl @ wq + bq
    k = x_cl @ wk + bk
    v = x_cl @ wv + bv
    attn = jax.nn.softmax(jnp.einsum('bic,bjc->bij', q, k), axis=-1)
    out = jnp.einsum('bij,bjc->bic', attn, v)
    out = gamma.reshape(()) * out + x_cl
    return jnp.transpose(out.reshape(B, H, W, C), (0, 3, 1, 2))


if __name__ == "__main__":
    # Small shapes consistent with the module (C divisible by 8).
    B, C, H, W = 2, 16, 16, 16
    Cqk = C // 8

    key = jax.random.PRNGKey(0)
    k0, k1, k2, k3, k4, k5, k6 = jax.random.split(key, 7)

    x = jax.random.normal(k0, (B, C, H, W), dtype=jnp.float32)

    # Conv2d(C, Cout, 1) weight (Cout, C, 1, 1) is equivalent to a (C, Cout) matmul.
    wq = jax.random.normal(k1, (C, Cqk), dtype=jnp.float32) * 0.1
    bq = jax.random.normal(k2, (Cqk,), dtype=jnp.float32) * 0.1
    wk = jax.random.normal(k3, (C, Cqk), dtype=jnp.float32) * 0.1
    bk = jax.random.normal(k4, (Cqk,), dtype=jnp.float32) * 0.1
    wv = jax.random.normal(k5, (C, C), dtype=jnp.float32) * 0.1
    bv = jax.random.normal(k6, (C,), dtype=jnp.float32) * 0.1
    # PyTorch inits gamma to 0 (output == x); nonzero exercises the attention path.
    gamma = jnp.array([0.5], dtype=jnp.float32)

    out = jax.block_until_ready(self_attention_pallas(x, wq, bq, wk, bk, wv, bv, gamma))
    ref = self_attention_ref(x, wq, bq, wk, bk, wv, bv, gamma)

    assert out.shape == (B, C, H, W)
    # bf16 MXU operands (f32 accumulation, f32 softmax stats, exact f32 residual)
    # -> compare against the f32 reference at bf16-level tolerance.
    err = jnp.max(jnp.abs(out - ref))
    assert jnp.allclose(out, ref, atol=1e-2, rtol=1e-2), f"max err {err}"

    print("KERNEL_OK")
</pallas_src>

<mosaic_0001>
module attributes {stable_mosaic.version = 11 : i64} {
  func.func @kernel(%arg0: i32, %arg1: i32, %arg2: memref<1x16x256xbf16, #tpu.memory_space<vmem>>, %arg3: memref<1x16x128xf32, #tpu.memory_space<vmem>>, %arg4: memref<32x16xbf16, #tpu.memory_space<vmem>>, %arg5: memref<32x1xf32, #tpu.memory_space<vmem>>, %arg6: memref<1xf32, #tpu.memory_space<smem>>, %arg7: memref<1x16x128xf32, #tpu.memory_space<vmem>>, %arg8: memref<8x256xbf16, #tpu.memory_space<vmem>>, %arg9: memref<256x8xbf16, #tpu.memory_space<vmem>>, %arg10: memref<16x256xbf16, #tpu.memory_space<vmem>>) attributes {dimension_semantics = [#tpu.dimension_semantics<parallel>, #tpu.dimension_semantics<arbitrary>], iteration_bounds = array<i64: 2, 2>, scalar_prefetch = 0 : i64, scratch_operands = 3 : i64, tpu.core_type = #tpu.core_type<tc>, window_params = [{transform_indices = @transform_0, window_bounds = array<i64: 1, 16, 256>}, {transform_indices = @transform_1, window_bounds = array<i64: 1, 16, 128>}, {pipeline_mode = #tpu.pipeline_mode<synchronous>, transform_indices = @transform_2, window_bounds = array<i64: 32, 16>}, {pipeline_mode = #tpu.pipeline_mode<synchronous>, transform_indices = @transform_3, window_bounds = array<i64: 32, 1>}, {transform_indices = @transform_4, window_bounds = array<i64: 1>}, {transform_indices = @transform_5, window_bounds = array<i64: 1, 16, 128>}]} {
    %c0_i32 = arith.constant 0 : i32
    %0 = arith.cmpi eq, %arg1, %c0_i32 : i32
    %1 = arith.extui %0 : i1 to i32
    %c0_i32_0 = arith.constant 0 : i32
    %2 = arith.cmpi ne, %1, %c0_i32_0 : i32
    scf.if %2 {
      %c0_17 = arith.constant 0 : index
      %c0_18 = arith.constant 0 : index
      %c0_19 = arith.constant 0 : index
      %46 = vector.load %arg2[%c0_17, %c0_18, %c0_19] : memref<1x16x256xbf16, #tpu.memory_space<vmem>>, vector<1x16x256xbf16>
      %47 = vector.shape_cast %46 : vector<1x16x256xbf16> to vector<16x256xbf16>
      %c0_20 = arith.constant 0 : index
      %c0_21 = arith.constant 0 : index
      %48 = vector.load %arg4[%c0_20, %c0_21] : memref<32x16xbf16, #tpu.memory_space<vmem>>, vector<32x16xbf16>
      %cst_22 = arith.constant dense<0.000000e+00> : vector<32x256xf32>
      %49 = tpu.matmul %48, %47, %cst_22 {dimension_numbers = #tpu.dot_dimension_numbers<[1], [0], [0], [1], [0, 0, 1, 1], [], []>} : vector<32x16xbf16>, vector<16x256xbf16>, vector<32x256xf32> -> vector<32x256xf32>
      %c0_23 = arith.constant 0 : index
      %c0_24 = arith.constant 0 : index
      %50 = vector.load %arg5[%c0_23, %c0_24] : memref<32x1xf32, #tpu.memory_space<vmem>>, vector<32x1xf32>
      %51 = vector.broadcast %50 : vector<32x1xf32> to vector<32x256xf32>
      %52 = arith.addf %49, %51 : vector<32x256xf32>
      %53 = vector.extract_strided_slice %52 {offsets = [0, 0], sizes = [16, 256], strides = [1, 1]} : vector<32x256xf32> to vector<16x256xf32>
      %54 = arith.truncf %53 : vector<16x256xf32> to vector<16x256xbf16>
      %c0_25 = arith.constant 0 : index
      %c0_26 = arith.constant 0 : index
      %55 = vector.load %arg10[%c0_25, %c0_26] : memref<16x256xbf16, #tpu.memory_space<vmem>>, vector<16x256xbf16>
      tpu.vector_store %arg10[%c0_25, %c0_26], %54 {strides = array<i32>} : memref<16x256xbf16, #tpu.memory_space<vmem>>, vector<16x256xbf16>,
      %56 = vector.extract_strided_slice %52 {offsets = [16, 0], sizes = [8, 256], strides = [1, 1]} : vector<32x256xf32> to vector<8x256xf32>
      %57 = arith.truncf %56 : vector<8x256xf32> to vector<8x256xbf16>
      %c0_27 = arith.constant 0 : index
      %c0_28 = arith.constant 0 : index
      %58 = vector.load %arg8[%c0_27, %c0_28] : memref<8x256xbf16, #tpu.memory_space<vmem>>, vector<8x256xbf16>
      tpu.vector_store %arg8[%c0_27, %c0_28], %57 {strides = array<i32>} : memref<8x256xbf16, #tpu.memory_space<vmem>>, vector<8x256xbf16>,
      %59 = vector.extract_strided_slice %52 {offsets = [24, 0], sizes = [8, 256], strides = [1, 1]} : vector<32x256xf32> to vector<8x256xf32>
      %60 = tpu.transpose %59, [1, 0] : vector<8x256xf32> -> vector<256x8xf32>
      %61 = arith.truncf %60 : vector<256x8xf32> to vector<256x8xbf16>
      %c0_29 = arith.constant 0 : index
      %c0_30 = arith.constant 0 : index
      %62 = vector.load %arg9[%c0_29, %c0_30] : memref<256x8xbf16, #tpu.memory_space<vmem>>, vector<256x8xbf16>
      tpu.vector_store %arg9[%c0_29, %c0_30], %61 {strides = array<i32>} : memref<256x8xbf16, #tpu.memory_space<vmem>>, vector<256x8xbf16>,
    } else {
    }
    %c128_i32 = arith.constant 128 : i32
    %3 = arith.muli %arg1, %c128_i32 : i32
    %4 = tpu.assume_multiple %3, 128 : i32
    %c0 = arith.constant 0 : index
    %5 = arith.index_cast %4 : i32 to index
    %6 = vector.load %arg8[%c0, %5] : memref<8x256xbf16, #tpu.memory_space<vmem>>, vector<8x128xbf16>
    %cst = arith.constant 0xFF800000 : f32
    %7 = vector.broadcast %cst : f32 to vector<1x128xf32>
    %cst_1 = arith.constant 0.000000e+00 : f32
    %8 = vector.broadcast %cst_1 : f32 to vector<1x128xf32>
    %cst_2 = arith.constant 0.000000e+00 : f32
    %9 = vector.broadcast %cst_2 : f32 to vector<16x128xf32>
    %c0_i32_3 = arith.constant 0 : i32
    %c256_i32 = arith.constant 256 : i32
    %10 = arith.muli %c0_i32_3, %c256_i32 : i32
    %11 = tpu.assume_multiple %10, 256 : i32
    %12 = arith.index_cast %11 : i32 to index
    %c0_4 = arith.constant 0 : index
    %13 = vector.load %arg9[%12, %c0_4] : memref<256x8xbf16, #tpu.memory_space<vmem>>, vector<256x8xbf16>
    %cst_5 = arith.constant dense<0.000000e+00> : vector<256x128xf32>
    %14 = tpu.matmul %13, %6, %cst_5 {dimension_numbers = #tpu.dot_dimension_numbers<[1], [0], [0], [1], [0, 0, 1, 1], [], []>} : vector<256x8xbf16>, vector<8x128xbf16>, vector<256x128xf32> -> vector<256x128xf32>
    %cst_6 = arith.constant dense<0xFF800000> : vector<128xf32>
    %15 = vector.multi_reduction <maximumf>, %14, %cst_6 [0] : vector<256x128xf32> to vector<128xf32>
    %16 = vector.shape_cast %15 : vector<128xf32> to vector<1x128xf32>
    %17 = arith.maximumf %7, %16 : vector<1x128xf32>
    %18 = arith.subf %7, %17 : vector<1x128xf32>
    %19 = math.exp %18 : vector<1x128xf32>
    %20 = vector.broadcast %17 : vector<1x128xf32> to vector<256x128xf32>
    %21 = arith.subf %14, %20 : vector<256x128xf32>
    %22 = math.exp %21 : vector<256x128xf32>
    %23 = arith.mulf %19, %8 : vector<1x128xf32>
    %cst_7 = arith.constant dense<0.000000e+00> : vector<128xf32>
    %24 = vector.multi_reduction <add>, %22, %cst_7 [0] : vector<256x128xf32> to vector<128xf32>
    %25 = vector.shape_cast %24 : vector<128xf32> to vector<1x128xf32>
    %26 = arith.addf %23, %25 : vector<1x128xf32>
    %c0_8 = arith.constant 0 : index
    %27 = arith.index_cast %11 : i32 to index
    %28 = vector.load %arg10[%c0_8, %27] : memref<16x256xbf16, #tpu.memory_space<vmem>>, vector<16x256xbf16>
    %29 = arith.truncf %22 : vector<256x128xf32> to vector<256x128xbf16>
    %cst_9 = arith.constant dense<0.000000e+00> : vector<16x128xf32>
    %30 = tpu.matmul %28, %29, %cst_9 {dimension_numbers = #tpu.dot_dimension_numbers<[1], [0], [0], [1], [0, 0, 1, 1], [], []>} : vector<16x256xbf16>, vector<256x128xbf16>, vector<16x128xf32> -> vector<16x128xf32>
    %31 = vector.broadcast %19 : vector<1x128xf32> to vector<16x128xf32>
    %32 = arith.mulf %31, %9 : vector<16x128xf32>
    %33 = arith.addf %32, %30 : vector<16x128xf32>
    %c1_i32 = arith.constant 1 : i32
    %34 = tpu.reciprocal %26 {approx = true} : vector<1x128xf32> -> vector<1x128xf32>
    %35 = vector.broadcast %34 : vector<1x128xf32> to vector<16x128xf32>
    %36 = arith.mulf %33, %35 : vector<16x128xf32>
    %c0_10 = arith.constant 0 : index
    %37 = memref.load %arg6[%c0_10] : memref<1xf32, #tpu.memory_space<smem>>
    %38 = vector.broadcast %37 : f32 to vector<16x128xf32>
    %39 = arith.mulf %38, %36 : vector<16x128xf32>
    %c0_11 = arith.constant 0 : index
    %c0_12 = arith.constant 0 : index
    %c0_13 = arith.constant 0 : index
    %40 = vector.load %arg3[%c0_11, %c0_12, %c0_13] : memref<1x16x128xf32, #tpu.memory_space<vmem>>, vector<1x16x128xf32>
    %41 = vector.shape_cast %40 : vector<1x16x128xf32> to vector<16x128xf32>
    %42 = arith.addf %39, %41 : vector<16x128xf32>
    %c0_14 = arith.constant 0 : index
    %c0_15 = arith.constant 0 : index
    %c0_16 = arith.constant 0 : index
    %43 = vector.load %arg7[%c0_14, %c0_15, %c0_16] : memref<1x16x128xf32, #tpu.memory_space<vmem>>, vector<1x16x128xf32>
    %44 = vector.shape_cast %43 : vector<1x16x128xf32> to vector<16x128xf32>
    %45 = vector.shape_cast %42 : vector<16x128xf32> to vector<1x16x128xf32>
    tpu.vector_store %arg7[%c0_14, %c0_15, %c0_16], %45 {strides = array<i32>} : memref<1x16x128xf32, #tpu.memory_space<vmem>>, vector<1x16x128xf32>,
    return
  }
  func.func @transform_0(%arg0: i32, %arg1: i32) -> (i32, i32, i32) {
    %c0_i32 = arith.constant 0 : i32
    %c0_i32_0 = arith.constant 0 : i32
    %c0_i32_1 = arith.constant 0 : i32
    return %arg0, %c0_i32, %c0_i32_0 : i32, i32, i32
  }
  func.func @transform_1(%arg0: i32, %arg1: i32) -> (i32, i32, i32) {
    %c0_i32 = arith.constant 0 : i32
    %c0_i32_0 = arith.constant 0 : i32
    return %arg0, %c0_i32, %arg1 : i32, i32, i32
  }
  func.func @transform_2(%arg0: i32, %arg1: i32) -> (i32, i32) {
    %c0_i32 = arith.constant 0 : i32
    %c0_i32_0 = arith.constant 0 : i32
    %c0_i32_1 = arith.constant 0 : i32
    return %c0_i32, %c0_i32_0 : i32, i32
  }
  func.func @transform_3(%arg0: i32, %arg1: i32) -> (i32, i32) {
    %c0_i32 = arith.constant 0 : i32
    %c0_i32_0 = arith.constant 0 : i32
    %c0_i32_1 = arith.constant 0 : i32
    return %c0_i32, %c0_i32_0 : i32, i32
  }
  func.func @transform_4(%arg0: i32, %arg1: i32) -> i32 {
    %c0_i32 = arith.constant 0 : i32
    %c0_i32_0 = arith.constant 0 : i32
    return %c0_i32 : i32
  }
  func.func @transform_5(%arg0: i32, %arg1: i32) -> (i32, i32, i32) {
    %c0_i32 = arith.constant 0 : i32
    %c0_i32_0 = arith.constant 0 : i32
    return %arg0, %c0_i32, %arg1 : i32, i32, i32
  }
}

</mosaic_0001>

<llo_original>
// kernel: tpu_custom_call.1
$region0: #{tpu_custom_call.1}
  #allocation0 [shape = 'u32[]', space=smem, size = 0x4, offset = 0x4, fixed_abs, tag = 'smem constant byte address 0x4 - core index']
  #allocation1 [shape = 'u32[144,128]{1,0:T(1,128)}', space=vmem, size = 0x12000, scoped, tag = 'internal scratch']
  #allocation2 [shape = 'bf16[8,256]{1,0:T(8,128)(2,1)}', space=vmem, size = 0x1000, scoped, tag = 'scratch operand']
  #allocation3 [shape = 'bf16[256,8]{1,0:T(8,128)(2,1)}', space=vmem, size = 0x10000, scoped, tag = 'scratch operand']
  #allocation4 [shape = 'bf16[16,256]{1,0:T(8,128)(2,1)}', space=vmem, size = 0x2000, scoped, tag = 'scratch operand']
  #allocation5 [shape = 'f32[1]{0:T(128)S(6)}', space=smem, size = 0x200, scoped, tag = 'scoped memory for tpu_custom_call.1']
  %s0 = inlined_call_operand.vmem [shape: bf16[2,16,256], index: 0, kind: input, shape index: {}]
  %s1 = inlined_call_operand.hbm [shape: f32[2,16,256], index: 1, kind: input, shape index: {}]
  %s2 = inlined_call_operand.vmem [shape: bf16[32,16], index: 2, kind: input, shape index: {}]
  %s3 = inlined_call_operand.vmem [shape: f32[32,1], index: 3, kind: input, shape index: {}]
  %s4 = inlined_call_operand.<no memory space> [shape: f32[1], index: 4, kind: input, shape index: {}]
  %s5 = inlined_call_operand.hbm [shape: f32[2,16,256], index: 5, kind: output, shape index: {}]
  %s6 = sld [smem:[#allocation0]]
  $region61: #{tpu_custom_call.1} parent=0
    _
  %s8 = ssub.s32 1, %s6
  %s9 = scalar_select 0, %s8, %s6
  %10 = sst [smem:[#allocation5]] %s4
  $region1: #{tpu_custom_call.1} parent=0
    #allocation6 [shape = 'u8[16384]{0}', space=vmem, size = 0x4000, scoped, tag = 'input window, operand 1']
    #allocation7 [shape = 's32[2]{0}', space=sflag, size = 0x8, scoped, tag = 'scoped memory for tpu_custom_call.1']
    #allocation8 [shape = 's32[2]{0}', space=sflag, size = 0x8, scoped, tag = 'scoped memory for tpu_custom_call.1']
    #allocation9 [shape = 'u8[16384]{0}', space=vmem, size = 0x4000, scoped, tag = 'output window, operand 0']
    %11 = vsyncpa [#allocation7], 0
    %s12 = scalar_lea.sflag [#allocation7], 1
    %13 = vsyncpa %s12, 0
    %14 = vsyncpa [#allocation8], 0
    %s15 = scalar_lea.sflag [#allocation8], 1
    %16 = vsyncpa %s15, 0
    loop: start=0, step=1, limit=6
    $region2: #{tpu_custom_call.1} parent=1 // loop_pre_header
      _
    $region3: #{tpu_custom_call.1} parent=1 // loop_header
      %s18 = sphi 0, %s22
      %p19 = scmp.ge.s32.totalorder %s18, 6
      %s25 = sphi 0, %s37
      %s26 = sphi 0, %s33
      %s27 = sphi 0, %s25
      %s28 = sphi 0, %s26
      %s29 = sphi 0, %s27
      %s30 = sphi 0, %s28
      %s40 = sphi 0, %s42
      %s43 = sphi 0, %s40
      %s44 = sphi 0, %s43
      %s60 = sphi 0, %s44
      %s68 = sphi 0, %s70
      %s71 = sphi 0, %s68
      %s72 = sphi 0, %s71
      %s88 = sphi 0, %s72
      %s92 = sphi 0, %s92
      %s94 = sphi 0, %s92
      %s95 = sphi 0, %s94
      %s109 = sphi 0, %s95
      %s113 = sphi 0, %s113
      %s115 = sphi 0, %s113
      %s116 = sphi 0, %s115
      %s130 = sphi 0, %s116
      %s134 = sphi 0, %s134
      %s136 = sphi 0, %s134
      %s137 = sphi 0, %s136
      %s151 = sphi 0, %s137
      %s159 = sphi 0, %s161
      %s162 = sphi 0, %s159
      %s163 = sphi 0, %s162
      %s179 = sphi 0, %s163
    $region4: #{tpu_custom_call.1} parent=1 // loop_header_branch
      %21 = sbr.rel (%p19) target = $region8
    $region5: #{tpu_custom_call.1} parent=1 // loop_body
      %s23 = ssub.s32 %s18, 1
      %s24 = ssub.s32 %s18, 2
      %s31 = sadd.s32 1, %s26
      %p32 = scmp.ge.s32.totalorder %s31, 2
      %s33 = scalar_select %p32, 0, %s31
      %s34 = sadd.s32 1, %s25
      %s35 = scalar_select %p32, %s34, %s25
      %p36 = scmp.ge.s32.totalorder %s35, 2
      %s37 = scalar_select %p36, 0, %s35
      %s38 = ssub.s32 %s25, %s37
      %p39 = scmp.eq.s32.totalorder %s38, 0
      %s41 = sadd.s32 %s40, 1
      %s42 = scalar_select %p39, %s40, %s41
      %p45 = pneg %p39
      %p46 = scmp.eq.s32.totalorder %s18, 3
      %p47 = por %p45, %p46
      %p48 = scmp.ne.s32.totalorder %s40, %s43
      %p49 = scmp.eq.s32.totalorder %s18, 0
      %p50 = por %p48, %p49
      %p51 = scmp.ne.s32.totalorder %s40, %s43
      %p52 = scmp.eq.s32.totalorder %s23, 3
      %p53 = por %p51, %p52
      %p54 = scmp.ne.s32.totalorder %s43, %s44
      %p55 = scmp.eq.s32.totalorder %s23, 0
      %p56 = por %p54, %p55
      %p57 = scmp.ne.s32.totalorder %s43, %s44
      %p58 = scmp.eq.s32.totalorder %s24, 3
      %p59 = por %p57, %p58
      %p61 = scmp.ne.s32.totalorder %s44, %s60
      %p62 = scmp.eq.s32.totalorder %s24, 0
      %p63 = por %p61, %p62
      %s64 = ssub.s32 %s25, %s37
      %s65 = ssub.s32 %s26, %s33
      %s66 = sor.u32 %s64, %s65
      %p67 = scmp.eq.s32.totalorder %s66, 0
      %s69 = sadd.s32 %s68, 1
      %s70 = scalar_select %p67, %s68, %s69
      %p73 = pneg %p67
      %p74 = scmp.eq.s32.totalorder %s18, 3
      %p75 = por %p73, %p74
      %p76 = scmp.ne.s32.totalorder %s68, %s71
      %p77 = scmp.eq.s32.totalorder %s18, 0
      %p78 = por %p76, %p77
      %p79 = scmp.ne.s32.totalorder %s68, %s71
      %p80 = scmp.eq.s32.totalorder %s23, 3
      %p81 = por %p79, %p80
      %p82 = scmp.ne.s32.totalorder %s71, %s72
      %p83 = scmp.eq.s32.totalorder %s23, 0
      %p84 = por %p82, %p83
      %p85 = scmp.ne.s32.totalorder %s71, %s72
      %p86 = scmp.eq.s32.totalorder %s24, 3
      %p87 = por %p85, %p86
      %p89 = scmp.ne.s32.totalorder %s72, %s88
      %p90 = scmp.eq.s32.totalorder %s24, 0
      %p91 = por %p89, %p90
      %s93 = sadd.s32 %s92, 1
      %p96 = scmp.eq.s32.totalorder %s18, 3
      %p97 = scmp.ne.s32.totalorder %s92, %s94
      %p98 = scmp.eq.s32.totalorder %s18, 0
      %p99 = por %p97, %p98
      %p100 = scmp.ne.s32.totalorder %s92, %s94
      %p101 = scmp.eq.s32.totalorder %s23, 3
      %p102 = por %p100, %p101
      %p103 = scmp.ne.s32.totalorder %s94, %s95
      %p104 = scmp.eq.s32.totalorder %s23, 0
      %p105 = por %p103, %p104
      %p106 = scmp.ne.s32.totalorder %s94, %s95
      %p107 = scmp.eq.s32.totalorder %s24, 3
      %p108 = por %p106, %p107
      %p110 = scmp.ne.s32.totalorder %s95, %s109
      %p111 = scmp.eq.s32.totalorder %s24, 0
      %p112 = por %p110, %p111
      %s114 = sadd.s32 %s113, 1
      %p117 = scmp.eq.s32.totalorder %s18, 3
      %p118 = scmp.ne.s32.totalorder %s113, %s115
      %p119 = scmp.eq.s32.totalorder %s18, 0
      %p120 = por %p118, %p119
      %p121 = scmp.ne.s32.totalorder %s113, %s115
      %p122 = scmp.eq.s32.totalorder %s23, 3
      %p123 = por %p121, %p122
      %p124 = scmp.ne.s32.totalorder %s115, %s116
      %p125 = scmp.eq.s32.totalorder %s23, 0
      %p126 = por %p124, %p125
      %p127 = scmp.ne.s32.totalorder %s115, %s116
      %p128 = scmp.eq.s32.totalorder %s24, 3
      %p129 = por %p127, %p128
      %p131 = scmp.ne.s32.totalorder %s116, %s130
      %p132 = scmp.eq.s32.totalorder %s24, 0
      %p133 = por %p131, %p132
      %s135 = sadd.s32 %s134, 1
      %p138 = scmp.eq.s32.totalorder %s18, 3
      %p139 = scmp.ne.s32.totalorder %s134, %s136
      %p140 = scmp.eq.s32.totalorder %s18, 0
      %p141 = por %p139, %p140
      %p142 = scmp.ne.s32.totalorder %s134, %s136
      %p143 = scmp.eq.s32.totalorder %s23, 3
      %p144 = por %p142, %p143
      %p145 = scmp.ne.s32.totalorder %s136, %s137
      %p146 = scmp.eq.s32.totalorder %s23, 0
      %p147 = por %p145, %p146
      %p148 = scmp.ne.s32.totalorder %s136, %s137
      %p149 = scmp.eq.s32.totalorder %s24, 3
      %p150 = por %p148, %p149
      %p152 = scmp.ne.s32.totalorder %s137, %s151
      %p153 = scmp.eq.s32.totalorder %s24, 0
      %p154 = por %p152, %p153
      %s155 = ssub.s32 %s25, %s37
      %s156 = ssub.s32 %s26, %s33
      %s157 = sor.u32 %s155, %s156
      %p158 = scmp.eq.s32.totalorder %s157, 0
      %s160 = sadd.s32 %s159, 1
      %s161 = scalar_select %p158, %s159, %s160
      %p164 = pneg %p158
      %p165 = scmp.eq.s32.totalorder %s18, 3
      %p166 = por %p164, %p165
      %p167 = scmp.ne.s32.totalorder %s159, %s162
      %p168 = scmp.eq.s32.totalorder %s18, 0
      %p169 = por %p167, %p168
      %p170 = scmp.ne.s32.totalorder %s159, %s162
      %p171 = scmp.eq.s32.totalorder %s23, 3
      %p172 = por %p170, %p171
      %p173 = scmp.ne.s32.totalorder %s162, %s163
      %p174 = scmp.eq.s32.totalorder %s23, 0
      %p175 = por %p173, %p174
      %p176 = scmp.ne.s32.totalorder %s162, %s163
      %p177 = scmp.eq.s32.totalorder %s24, 3
      %p178 = por %p176, %p177
      %p180 = scmp.ne.s32.totalorder %s163, %s179
      %p181 = scmp.eq.s32.totalorder %s24, 0
      %p182 = por %p180, %p181
      %p183 = scmp.le.s32.totalorder 1, %s18
      %p184 = scmp.lt.s32.totalorder %s18, 5
      %p185 = pnand %p183, %p184
      %p186 = pneg %p185
      // Predicated region
      $region9: #{tpu_custom_call.1} parent=5 // pred_check
        _
      $region10: #{tpu_custom_call.1} parent=5 // pred_check_branch
        %188 = sbr.rel (%p185) target = $region12
      $region11: #{tpu_custom_call.1} parent=5 // pred_region
        %s189 = ssub.s32 %s18, 1
        // Predicated region
        $region13: #{tpu_custom_call.1} parent=11 // pred_check
          %p190 = pneg %p105
        $region14: #{tpu_custom_call.1} parent=11 // pred_check_branch
          %192 = sbr.rel (%p190) target = $region16
        $region15: #{tpu_custom_call.1} parent=11 // pred_region
          _
        $region16: #{tpu_custom_call.1} parent=11 // pred_fallthru
          _
        // Predicated region
        $region17: #{tpu_custom_call.1} parent=11 // pred_check
          %p193 = pneg %p126
        $region18: #{tpu_custom_call.1} parent=11 // pred_check_branch
          %195 = sbr.rel (%p193) target = $region20
        $region19: #{tpu_custom_call.1} parent=11 // pred_region
          _
        $region20: #{tpu_custom_call.1} parent=11 // pred_fallthru
          _
        // Predicated region
        $region21: #{tpu_custom_call.1} parent=11 // pred_check
          %p196 = pneg %p147
        $region22: #{tpu_custom_call.1} parent=11 // pred_check_branch
          %198 = sbr.rel (%p196) target = $region24
        $region23: #{tpu_custom_call.1} parent=11 // pred_region
          _
        $region24: #{tpu_custom_call.1} parent=11 // pred_fallthru
          _
      $region12: #{tpu_custom_call.1} parent=5 // pred_fallthru
        _
      %p199 = scmp.lt.s32.totalorder %s18, 4
      // Predicated region
      $region25: #{tpu_custom_call.1} parent=5 // pred_check
        %p200 = pneg %p199
      $region26: #{tpu_custom_call.1} parent=5 // pred_check_branch
        %202 = sbr.rel (%p200) target = $region28
      $region27: #{tpu_custom_call.1} parent=5 // pred_region
        // Predicated region
        $region29: #{tpu_custom_call.1} parent=27 // pred_check
          %p203 = pneg %p50
        $region30: #{tpu_custom_call.1} parent=27 // pred_check_branch
          %205 = sbr.rel (%p203) target = $region32
        $region31: #{tpu_custom_call.1} parent=27 // pred_region
          %p206 = scmp.lt.s32.totalorder %s25, 1
          %s207 = scalar_select %p206, %s25, 1
          %s208 = smul.addr %s207, 4
          %s209 = smul.addr %s208, 4
          %s210 = scalar_lea.vmem %s0, %s209
        $region32: #{tpu_custom_call.1} parent=27 // pred_fallthru
          _
        // Predicated region
        $region33: #{tpu_custom_call.1} parent=27 // pred_check
          %p211 = pneg %p78
        $region34: #{tpu_custom_call.1} parent=27 // pred_check_branch
          %213 = sbr.rel (%p211) target = $region36
        $region35: #{tpu_custom_call.1} parent=27 // pred_region
          %s214 = sand.u32 %s68, 1
          %s215 = scalar_lea.sflag [#allocation7], %s214
          %s216 = sand.u32 %s68, 1
          %s217 = smul.addr %s216, 16
          %s218 = scalar_lea.vmem [#allocation6], %s217
          %s220 = ssub.s32 256, 256
          %221 = vsyncadd %s215, %s220
          %s222 = smul.addr %s25, 4
          %s223 = sadd.s32 %s26, %s222
          %s224 = smul.addr %s223, 128
          %s225 = scalar_lea.hbm %s1, %s224
          %s226 = sshll.u32 %s218, 4
          %s227 = int_to_ptr.vmem [resolvable:$true] %s226
          %232 = dma.hbm_to_vmem [thread:$0]  %s225, 256, %s227, %s215, 256, 128, 8
        $region36: #{tpu_custom_call.1} parent=27 // pred_fallthru
          _
      $region28: #{tpu_custom_call.1} parent=5 // pred_fallthru
        _
      %p233 = scmp.le.s32.totalorder 1, %s18
      %p234 = scmp.lt.s32.totalorder %s18, 5
      %p235 = pnand %p233, %p234
      %p236 = pneg %p235
      // Predicated region
      $region37: #{tpu_custom_call.1} parent=5 // pred_check
        _
      $region38: #{tpu_custom_call.1} parent=5 // pred_check_branch
        %238 = sbr.rel (%p235) target = $region40
      $region39: #{tpu_custom_call.1} parent=5 // pred_region
        %s239 = ssub.s32 %s18, 1
        %s240 = sand.u32 %s71, 1
        %s241 = scalar_lea.sflag [#allocation7], %s240
        %s242 = sand.u32 %s71, 1
        %s243 = smul.addr %s242, 16
        %s244 = scalar_lea.vmem [#allocation6], %s243
        // Predicated region
        $region41: #{tpu_custom_call.1} parent=39 // pred_check
          %p245 = pneg %p84
        $region42: #{tpu_custom_call.1} parent=39 // pred_check_branch
          %247 = sbr.rel (%p245) target = $region44
        $region43: #{tpu_custom_call.1} parent=39 // pred_region
          %248 = dma.done %s241, 256
        $region44: #{tpu_custom_call.1} parent=39 // pred_fallthru
          _
        %p249 = scmp.lt.s32.totalorder %s27, 1
        %s250 = scalar_select %p249, %s27, 1
        %s251 = smul.addr %s250, 4
        %s252 = smul.addr %s251, 4
        %s253 = scalar_lea.vmem %s0, %s252
        %p254 = pneg %p56
        %p255 = pneg %p53
        %s256 = sand.u32 %s71, 1
        %s257 = scalar_lea.sflag [#allocation7], %s256
        %s258 = sand.u32 %s71, 1
        %s259 = smul.addr %s258, 16
        %s260 = scalar_lea.vmem [#allocation6], %s259
        %p261 = pneg %p84
        %p262 = pneg %p81
        %p263 = pneg %p105
        %p264 = pneg %p102
        %p265 = pneg %p126
        %p266 = pneg %p123
        %p267 = pneg %p147
        %p268 = pneg %p144
        %p269 = pneg %p175
        %p270 = pneg %p172
        %s271 = sand.u32 %s162, 1
        %s272 = scalar_lea.sflag [#allocation8], %s271
        %s273 = sand.u32 %s162, 1
        %s274 = smul.addr %s273, 16
        %s275 = scalar_lea.vmem [#allocation9], %s274
        %p276 = scmp.lt.s32.totalorder %s27, 1
        %s277 = scalar_select %p276, %s27, 1
        %s278 = smul.addr %s277, 4
        %s279 = smul.addr %s278, 4
        %s280 = scalar_lea.vmem %s0, %s279
        %p282 = scmp.eq.s32.totalorder %s28, 0
        // Predicated region
        $region45: #{tpu_custom_call.1} parent=39 // pred_check
          %p283 = pneg %p282
        $region46: #{tpu_custom_call.1} parent=39 // pred_check_branch
          %285 = sbr.rel (%p283) target = $region48
        $region47: #{tpu_custom_call.1} parent=39 // pred_region
          %v286 = vld [vmem:[%s280] sm:$0xff]
          %v287 = vld [vmem:[%s280 + $0x8] sm:$0xff]
          %v288 = vld [vmem:[%s2] sm:$0xf]
          %v289 = vld [vmem:[%s2 + $0x4] sm:$0xf]
          %v290 = vld [vmem:[%s2 + $0x8] sm:$0xf]
          %v291 = vld [vmem:[%s2 + $0xc] sm:$0xf]
          %v292 = vld [vmem:[%s3] sm:$0xff]
          %v293 = vld [vmem:[%s3 + $0x8] sm:$0xff]
          %v294 = vld [vmem:[%s3 + $0x10] sm:$0xff]
          %v295 = vld [vmem:[%s3 + $0x18] sm:$0xff]
          %297 = vset.pattern.permute.xlu0 0
          %298 = vperm.xlu0 %297, %v292
          %v299 = vpop.permute.xlu0 %298
          %302 = vset.pattern.permute.xlu0 0
          %303 = vperm.xlu0 %302, %v293
          %v304 = vpop.permute.xlu0 %303
          %307 = vset.pattern.permute.xlu0 0
          %308 = vperm.xlu0 %307, %v294
          %v309 = vpop.permute.xlu0 %308
          %312 = vset.pattern.permute.xlu0 0
          %313 = vperm.xlu0 %312, %v295
          %v314 = vpop.permute.xlu0 %313
          %v320 = vunpack.c.l.b16 %v288
          %v321 = vunpack.c.l.b16 %v289
          %v322 = vunpack.c.l.b16 %v290
          %v323 = vunpack.c.l.b16 %v291
          %v324 = vpack.c.b16 %v321, %v320
          %v325 = vpack.c.b16 %v323, %v322
          %v328 = vunpack.c.l.b16 %v286
          %v329 = vunpack.c.h.b16 %v286
          %v330 = vunpack.c.l.b16 %v287
          %v331 = vunpack.c.h.b16 %v287
          %v332 = vpack.c.b16 %v330, %v328
          %v333 = vpack.c.b16 %v331, %v329
          %vm336 = vcmask 130048
          %v338 = vsel %vm336, %v324, 0
          %v341 = vsel %vm336, %v325, 0
          %343 = vmatprep.subr.bf16.mxu0 0
          %344 = vmatpush1.bf16.msra.mxu0 0
          %345 = vmatprep.subr.bf16.mxu0 0
          %346 = vmatpush1.bf16.msra.mxu0 0
          %347 = vmatprep.subr.bf16.mxu0 0
          %348 = vmatpush1.bf16.msra.mxu0 0
          %349 = vmatprep.subr.bf16.mxu0 0
          %350 = vmatpush1.bf16.msra.mxu0 0
          %351 = vmatprep.subr.bf16.mxu0 0
          %352 = vmatpush1.bf16.msra.mxu0 0
          %353 = vmatprep.subr.bf16.mxu0 0
          %354 = vmatpush1.bf16.msra.mxu0 0
          %355 = vmatprep.subr.bf16.mxu0 0
          %356 = vmatpush1.bf16.msra.mxu0 0
          %357 = vmatprep.subr.bf16.mxu0 %v333
          %358 = vmatpush1.bf16.msra.mxu0 %v332
          %359 = vmatprep.subr.bf16.mxu0 0
          %360 = vmatpush2.bf16.msra.mxu0 0
          %361 = vmatprep.subr.bf16.mxu0 0
          %362 = vmatpush2.bf16.msra.mxu0 0
          %363 = vmatprep.subr.bf16.mxu0 0
          %364 = vmatpush2.bf16.msra.mxu0 0
          %365 = vmatprep.subr.bf16.mxu0 0
          %366 = vmatpush2.bf16.msra.mxu0 0
          %367 = vmatprep.subr.bf16.mxu0 0
          %368 = vmatpush2.bf16.msra.mxu0 0
          %369 = vmatprep.subr.bf16.mxu0 0
          %370 = vmatpush2.bf16.msra.mxu0 0
          %371 = vmatprep.subr.bf16.mxu0 0
          %372 = vmatpush2.bf16.msra.mxu0 0
          %373 = vmatprep.subr.bf16.mxu0 0
          %374 = vmatpush2.bf16.msra.mxu0 0
          %375 = vmatprep.mubr.bf16.mxu0 0
          %376 = vmatmul.mubr.bf16.gmra.mxu0 %v338
          %v377 = vpop.f32.mrf.mxu0
          %v378 = vadd.f32 %v299, %v377
          %v379 = vpop.f32.mrf.mxu0
          %v380 = vadd.f32 %v299, %v379
          %v381 = vpop.f32.mrf.mxu0
          %v382 = vadd.f32 %v304, %v381
          %v383 = vpop.f32.mrf.mxu0
          %v384 = vadd.f32 %v304, %v383
          %385 = vmatprep.mubr.bf16.mxu0 0
          %386 = vmatmul.mubr.bf16.gmra.mxu0 %v341
          %v387 = vpop.f32.mrf.mxu0
          %v388 = vadd.f32 %v309, %v387
          %v389 = vpop.f32.mrf.mxu0
          %v390 = vadd.f32 %v309, %v389
          %v391 = vpop.f32.mrf.mxu0
          %v392 = vadd.f32 %v314, %v391
          %v393 = vpop.f32.mrf.mxu0
          %v394 = vadd.f32 %v314, %v393
          %395 = vdwg.mxu0
          %v396 = vpack.c.bf16 %v382, %v378
          %v397 = vpack.c.bf16 %v384, %v380
          %v400 = vunpack.c.l.b16 %v396
          %v401 = vunpack.c.l.b16 %v397
          %v402 = vunpack.c.h.b16 %v396
          %v403 = vunpack.c.h.b16 %v397
          %v404 = vpack.c.b16 %v401, %v400
          %v405 = vpack.c.b16 %v403, %v402
          %408 = vst [vmem:[#allocation4] sm:$0xff] %v404
          %409 = vst [vmem:[#allocation4 + $0x8] sm:$0xff] %v405
          %v410 = vpack.c.bf16 %v388, %v388
          %v411 = vpack.c.bf16 %v390, %v390
          %v414 = vunpack.c.l.b16 %v410
          %v415 = vunpack.c.l.b16 %v411
          %v416 = vpack.c.b16 %v415, %v414
          %418 = vst [vmem:[#allocation2] sm:$0xff] %v416
          %419 = vxpose.xlu0.b32.start [1/16] %v392, 128
          %420 = vxpose.xlu0.b32.cont [2/16] 0.0, 128
          %421 = vxpose.xlu0.b32.cont [3/16] 0.0, 128
          %422 = vxpose.xlu0.b32.cont [4/16] 0.0, 128
          %423 = vxpose.xlu0.b32.cont [5/16] 0.0, 128
          %424 = vxpose.xlu0.b32.cont [6/16] 0.0, 128
          %425 = vxpose.xlu0.b32.cont [7/16] 0.0, 128
          %426 = vxpose.xlu0.b32.cont [8/16] 0.0, 128
          %427 = vxpose.xlu0.b32.cont [9/16] 0.0, 128
          %428 = vxpose.xlu0.b32.cont [10/16] 0.0, 128
          %429 = vxpose.xlu0.b32.cont [11/16] 0.0, 128
          %430 = vxpose.xlu0.b32.cont [12/16] 0.0, 128
          %431 = vxpose.xlu0.b32.cont [13/16] 0.0, 128
          %432 = vxpose.xlu0.b32.cont [14/16] 0.0, 128
          %433 = vxpose.xlu0.b32.cont [15/16] 0.0, 128
          %434 = vxpose.xlu0.b32.end [16/16] 0.0, 128
          %v435 = vpop.trf.xlu0
          %v436 = vpop.trf.xlu0
          %v437 = vpop.trf.xlu0
          %v438 = vpop.trf.xlu0
          %v439 = vpop.trf.xlu0
          %v440 = vpop.trf.xlu0
          %v441 = vpop.trf.xlu0
          %v442 = vpop.trf.xlu0
          %v443 = vpop.trf.xlu0
          %v444 = vpop.trf.xlu0
          %v445 = vpop.trf.xlu0
          %v446 = vpop.trf.xlu0
          %v447 = vpop.trf.xlu0
          %v448 = vpop.trf.xlu0
          %v449 = vpop.trf.xlu0
          %v450 = vpop.trf.xlu0
          %451 = vxpose.xlu0.b32.start [1/16] %v394, 128
          %452 = vxpose.xlu0.b32.cont [2/16] 0.0, 128
          %453 = vxpose.xlu0.b32.cont [3/16] 0.0, 128
          %454 = vxpose.xlu0.b32.cont [4/16] 0.0, 128
          %455 = vxpose.xlu0.b32.cont [5/16] 0.0, 128
          %456 = vxpose.xlu0.b32.cont [6/16] 0.0, 128
          %457 = vxpose.xlu0.b32.cont [7/16] 0.0, 128
          %458 = vxpose.xlu0.b32.cont [8/16] 0.0, 128
          %459 = vxpose.xlu0.b32.cont [9/16] 0.0, 128
          %460 = vxpose.xlu0.b32.cont [10/16] 0.0, 128
          %461 = vxpose.xlu0.b32.cont [11/16] 0.0, 128
          %462 = vxpose.xlu0.b32.cont [12/16] 0.0, 128
          %463 = vxpose.xlu0.b32.cont [13/16] 0.0, 128
          %464 = vxpose.xlu0.b32.cont [14/16] 0.0, 128
          %465 = vxpose.xlu0.b32.cont [15/16] 0.0, 128
          %466 = vxpose.xlu0.b32.end [16/16] 0.0, 128
          %v467 = vpop.trf.xlu0
          %v468 = vpop.trf.xlu0
          %v469 = vpop.trf.xlu0
          %v470 = vpop.trf.xlu0
          %v471 = vpop.trf.xlu0
          %v472 = vpop.trf.xlu0
          %v473 = vpop.trf.xlu0
          %v474 = vpop.trf.xlu0
          %v475 = vpop.trf.xlu0
          %v476 = vpop.trf.xlu0
          %v477 = vpop.trf.xlu0
          %v478 = vpop.trf.xlu0
          %v479 = vpop.trf.xlu0
          %v480 = vpop.trf.xlu0
          %v481 = vpop.trf.xlu0
          %v482 = vpop.trf.xlu0
          %v483 = vpack.c.bf16 %v436, %v435
          %v484 = vpack.c.bf16 %v438, %v437
          %v485 = vpack.c.bf16 %v440, %v439
          %v486 = vpack.c.bf16 %v442, %v441
          %v487 = vpack.c.bf16 %v444, %v443
          %v488 = vpack.c.bf16 %v446, %v445
          %v489 = vpack.c.bf16 %v448, %v447
          %v490 = vpack.c.bf16 %v450, %v449
          %v491 = vpack.c.bf16 %v468, %v467
          %v492 = vpack.c.bf16 %v470, %v469
          %v493 = vpack.c.bf16 %v472, %v471
          %v494 = vpack.c.bf16 %v474, %v473
          %v495 = vpack.c.bf16 %v476, %v475
          %v496 = vpack.c.bf16 %v478, %v477
          %v497 = vpack.c.bf16 %v480, %v479
          %v498 = vpack.c.bf16 %v482, %v481
          %v515 = vunpack.c.l.b16 %v483
          %v516 = vunpack.c.h.b16 %v483
          %v517 = vunpack.c.l.b16 %v484
          %v518 = vunpack.c.h.b16 %v484
          %v519 = vunpack.c.l.b16 %v485
          %v520 = vunpack.c.h.b16 %v485
          %v521 = vunpack.c.l.b16 %v486
          %v522 = vunpack.c.h.b16 %v486
          %v523 = vunpack.c.l.b16 %v487
          %v524 = vunpack.c.h.b16 %v487
          %v525 = vunpack.c.l.b16 %v488
          %v526 = vunpack.c.h.b16 %v488
          %v527 = vunpack.c.l.b16 %v489
          %v528 = vunpack.c.h.b16 %v489
          %v529 = vunpack.c.l.b16 %v490
          %v530 = vunpack.c.h.b16 %v490
          %v531 = vunpack.c.l.b16 %v491
          %v532 = vunpack.c.h.b16 %v491
          %v533 = vunpack.c.l.b16 %v492
          %v534 = vunpack.c.h.b16 %v492
          %v535 = vunpack.c.l.b16 %v493
          %v536 = vunpack.c.h.b16 %v493
          %v537 = vunpack.c.l.b16 %v494
          %v538 = vunpack.c.h.b16 %v494
          %v539 = vunpack.c.l.b16 %v495
          %v540 = vunpack.c.h.b16 %v495
          %v541 = vunpack.c.l.b16 %v496
          %v542 = vunpack.c.h.b16 %v496
          %v543 = vunpack.c.l.b16 %v497
          %v544 = vunpack.c.h.b16 %v497
          %v545 = vunpack.c.l.b16 %v498
          %v546 = vunpack.c.h.b16 %v498
          %v547 = vpack.c.b16 %v515, %v515
          %v548 = vpack.c.b16 %v516, %v516
          %v549 = vpack.c.b16 %v517, %v517
          %v550 = vpack.c.b16 %v518, %v518
          %v551 = vpack.c.b16 %v519, %v519
          %v552 = vpack.c.b16 %v520, %v520
          %v553 = vpack.c.b16 %v521, %v521
          %v554 = vpack.c.b16 %v522, %v522
          %v555 = vpack.c.b16 %v523, %v523
          %v556 = vpack.c.b16 %v524, %v524
          %v557 = vpack.c.b16 %v525, %v525
          %v558 = vpack.c.b16 %v526, %v526
          %v559 = vpack.c.b16 %v527, %v527
          %v560 = vpack.c.b16 %v528, %v528
          %v561 = vpack.c.b16 %v529, %v529
          %v562 = vpack.c.b16 %v530, %v530
          %v563 = vpack.c.b16 %v531, %v531
          %v564 = vpack.c.b16 %v532, %v532
          %v565 = vpack.c.b16 %v533, %v533
          %v566 = vpack.c.b16 %v534, %v534
          %v567 = vpack.c.b16 %v535, %v535
          %v568 = vpack.c.b16 %v536, %v536
          %v569 = vpack.c.b16 %v537, %v537
          %v570 = vpack.c.b16 %v538, %v538
          %v571 = vpack.c.b16 %v539, %v539
          %v572 = vpack.c.b16 %v540, %v540
          %v573 = vpack.c.b16 %v541, %v541
          %v574 = vpack.c.b16 %v542, %v542
          %v575 = vpack.c.b16 %v543, %v543
          %v576 = vpack.c.b16 %v544, %v544
          %v577 = vpack.c.b16 %v545, %v545
          %v578 = vpack.c.b16 %v546, %v546
          %vm611 = vcmask 60416
          %612 = vst.msk [vmem:[#allocation3] sm:$0xf] %vm611, %v547
          %613 = vst.msk [vmem:[#allocation3 + $0x4] sm:$0xf] %vm611, %v548
          %614 = vst.msk [vmem:[#allocation3 + $0x8] sm:$0xf] %vm611, %v549
          %615 = vst.msk [vmem:[#allocation3 + $0xc] sm:$0xf] %vm611, %v550
          %616 = vst.msk [vmem:[#allocation3 + $0x10] sm:$0xf] %vm611, %v551
          %617 = vst.msk [vmem:[#allocation3 + $0x14] sm:$0xf] %vm611, %v552
          %618 = vst.msk [vmem:[#allocation3 + $0x18] sm:$0xf] %vm611, %v553
          %619 = vst.msk [vmem:[#allocation3 + $0x1c] sm:$0xf] %vm611, %v554
          %620 = vst.msk [vmem:[#allocation3 + $0x20] sm:$0xf] %vm611, %v555
          %621 = vst.msk [vmem:[#allocation3 + $0x24] sm:$0xf] %vm611, %v556
          %622 = vst.msk [vmem:[#allocation3 + $0x28] sm:$0xf] %vm611, %v557
          %623 = vst.msk [vmem:[#allocation3 + $0x2c] sm:$0xf] %vm611, %v558
          %624 = vst.msk [vmem:[#allocation3 + $0x30] sm:$0xf] %vm611, %v559
          %625 = vst.msk [vmem:[#allocation3 + $0x34] sm:$0xf] %vm611, %v560
          %626 = vst.msk [vmem:[#allocation3 + $0x38] sm:$0xf] %vm611, %v561
          %627 = vst.msk [vmem:[#allocation3 + $0x3c] sm:$0xf] %vm611, %v562
          %628 = vst.msk [vmem:[#allocation3 + $0x40] sm:$0xf] %vm611, %v563
          %629 = vst.msk [vmem:[#allocation3 + $0x44] sm:$0xf] %vm611, %v564
          %630 = vst.msk [vmem:[#allocation3 + $0x48] sm:$0xf] %vm611, %v565
          %631 = vst.msk [vmem:[#allocation3 + $0x4c] sm:$0xf] %vm611, %v566
          %632 = vst.msk [vmem:[#allocation3 + $0x50] sm:$0xf] %vm611, %v567
          %633 = vst.msk [vmem:[#allocation3 + $0x54] sm:$0xf] %vm611, %v568
          %634 = vst.msk [vmem:[#allocation3 + $0x58] sm:$0xf] %vm611, %v569
          %635 = vst.msk [vmem:[#allocation3 + $0x5c] sm:$0xf] %vm611, %v570
          %636 = vst.msk [vmem:[#allocation3 + $0x60] sm:$0xf] %vm611, %v571
          %637 = vst.msk [vmem:[#allocation3 + $0x64] sm:$0xf] %vm611, %v572
          %638 = vst.msk [vmem:[#allocation3 + $0x68] sm:$0xf] %vm611, %v573
          %639 = vst.msk [vmem:[#allocation3 + $0x6c] sm:$0xf] %vm611, %v574
          %640 = vst.msk [vmem:[#allocation3 + $0x70] sm:$0xf] %vm611, %v575
          %641 = vst.msk [vmem:[#allocation3 + $0x74] sm:$0xf] %vm611, %v576
          %642 = vst.msk [vmem:[#allocation3 + $0x78] sm:$0xf] %vm611, %v577
          %643 = vst.msk [vmem:[#allocation3 + $0x7c] sm:$0xf] %vm611, %v578
        $region48: #{tpu_custom_call.1} parent=39 // pred_fallthru
          _
        %s644 = smul.u32 %s28, 128
        %s645 = sshra.s32 %s644, 7
        %s646 = sand.u32 %s644, 127
        %s647 = smul.addr %s645, 4
        %s648 = scalar_lea.vmem [#allocation2], %s647
        %v649 = vld [vmem:[%s648] sm:$0xf]
        %v650 = vld [vmem:[#allocation3] sm:$0xf]
        %v651 = vld [vmem:[#allocation3 + $0x4] sm:$0xf]
        %v652 = vld [vmem:[#allocation3 + $0x8] sm:$0xf]
        %v653 = vld [vmem:[#allocation3 + $0xc] sm:$0xf]
        %v654 = vld [vmem:[#allocation3 + $0x10] sm:$0xf]
        %v655 = vld [vmem:[#allocation3 + $0x14] sm:$0xf]
        %v656 = vld [vmem:[#allocation3 + $0x18] sm:$0xf]
        %v657 = vld [vmem:[#allocation3 + $0x1c] sm:$0xf]
        %v658 = vld [vmem:[#allocation3 + $0x20] sm:$0xf]
        %v659 = vld [vmem:[#allocation3 + $0x24] sm:$0xf]
        %v660 = vld [vmem:[#allocation3 + $0x28] sm:$0xf]
        %v661 = vld [vmem:[#allocation3 + $0x2c] sm:$0xf]
        %v662 = vld [vmem:[#allocation3 + $0x30] sm:$0xf]
        %v663 = vld [vmem:[#allocation3 + $0x34] sm:$0xf]
        %v664 = vld [vmem:[#allocation3 + $0x38] sm:$0xf]
        %v665 = vld [vmem:[#allocation3 + $0x3c] sm:$0xf]
        %v666 = vld [vmem:[#allocation3 + $0x40] sm:$0xf]
        %v667 = vld [vmem:[#allocation3 + $0x44] sm:$0xf]
        %v668 = vld [vmem:[#allocation3 + $0x48] sm:$0xf]
        %v669 = vld [vmem:[#allocation3 + $0x4c] sm:$0xf]
        %v670 = vld [vmem:[#allocation3 + $0x50] sm:$0xf]
        %v671 = vld [vmem:[#allocation3 + $0x54] sm:$0xf]
        %v672 = vld [vmem:[#allocation3 + $0x58] sm:$0xf]
        %v673 = vld [vmem:[#allocation3 + $0x5c] sm:$0xf]
        %v674 = vld [vmem:[#allocation3 + $0x60] sm:$0xf]
        %v675 = vld [vmem:[#allocation3 + $0x64] sm:$0xf]
        %v676 = vld [vmem:[#allocation3 + $0x68] sm:$0xf]
        %v677 = vld [vmem:[#allocation3 + $0x6c] sm:$0xf]
        %v678 = vld [vmem:[#allocation3 + $0x70] sm:$0xf]
        %v679 = vld [vmem:[#allocation3 + $0x74] sm:$0xf]
        %v680 = vld [vmem:[#allocation3 + $0x78] sm:$0xf]
        %v681 = vld [vmem:[#allocation3 + $0x7c] sm:$0xf]
        %v714 = vunpack.c.l.b16 %v650
        %v715 = vunpack.c.l.b16 %v651
        %v716 = vunpack.c.l.b16 %v652
        %v717 = vunpack.c.l.b16 %v653
        %v718 = vunpack.c.l.b16 %v654
        %v719 = vunpack.c.l.b16 %v655
        %v720 = vunpack.c.l.b16 %v656
        %v721 = vunpack.c.l.b16 %v657
        %v722 = vunpack.c.l.b16 %v658
        %v723 = vunpack.c.l.b16 %v659
        %v724 = vunpack.c.l.b16 %v660
        %v725 = vunpack.c.l.b16 %v661
        %v726 = vunpack.c.l.b16 %v662
        %v727 = vunpack.c.l.b16 %v663
        %v728 = vunpack.c.l.b16 %v664
        %v729 = vunpack.c.l.b16 %v665
        %v730 = vunpack.c.l.b16 %v666
        %v731 = vunpack.c.l.b16 %v667
        %v732 = vunpack.c.l.b16 %v668
        %v733 = vunpack.c.l.b16 %v669
        %v734 = vunpack.c.l.b16 %v670
        %v735 = vunpack.c.l.b16 %v671
        %v736 = vunpack.c.l.b16 %v672
        %v737 = vunpack.c.l.b16 %v673
        %v738 = vunpack.c.l.b16 %v674
        %v739 = vunpack.c.l.b16 %v675
        %v740 = vunpack.c.l.b16 %v676
        %v741 = vunpack.c.l.b16 %v677
        %v742 = vunpack.c.l.b16 %v678
        %v743 = vunpack.c.l.b16 %v679
        %v744 = vunpack.c.l.b16 %v680
        %v745 = vunpack.c.l.b16 %v681
        %v746 = vpack.c.b16 %v715, %v714
        %v747 = vpack.c.b16 %v717, %v716
        %v748 = vpack.c.b16 %v719, %v718
        %v749 = vpack.c.b16 %v721, %v720
        %v750 = vpack.c.b16 %v723, %v722
        %v751 = vpack.c.b16 %v725, %v724
        %v752 = vpack.c.b16 %v727, %v726
        %v753 = vpack.c.b16 %v729, %v728
        %v754 = vpack.c.b16 %v731, %v730
        %v755 = vpack.c.b16 %v733, %v732
        %v756 = vpack.c.b16 %v735, %v734
        %v757 = vpack.c.b16 %v737, %v736
        %v758 = vpack.c.b16 %v739, %v738
        %v759 = vpack.c.b16 %v741, %v740
        %v760 = vpack.c.b16 %v743, %v742
        %v761 = vpack.c.b16 %v745, %v744
        %vm762 = vcmask 64512
        %v764 = vsel %vm762, %v746, 0
        %v767 = vsel %vm762, %v747, 0
        %v770 = vsel %vm762, %v748, 0
        %v773 = vsel %vm762, %v749, 0
        %v776 = vsel %vm762, %v750, 0
        %v779 = vsel %vm762, %v751, 0
        %v782 = vsel %vm762, %v752, 0
        %v785 = vsel %vm762, %v753, 0
        %v788 = vsel %vm762, %v754, 0
        %v791 = vsel %vm762, %v755, 0
        %v794 = vsel %vm762, %v756, 0
        %v797 = vsel %vm762, %v757, 0
        %v800 = vsel %vm762, %v758, 0
        %v803 = vsel %vm762, %v759, 0
        %v806 = vsel %vm762, %v760, 0
        %v809 = vsel %vm762, %v761, 0
        %vm811 = vcmask 1043456
        %v813 = vsel %vm811, %v649, 0
        %815 = vmatprep.subr.bf16.mxu0 0
        %816 = vmatpush1.bf16.msra.mxu0 0
        %817 = vmatprep.subr.bf16.mxu0 0
        %818 = vmatpush1.bf16.msra.mxu0 0
        %819 = vmatprep.subr.bf16.mxu0 0
        %820 = vmatpush1.bf16.msra.mxu0 0
        %821 = vmatprep.subr.bf16.mxu0 0
        %822 = vmatpush1.bf16.msra.mxu0 0
        %823 = vmatprep.subr.bf16.mxu0 0
        %824 = vmatpush1.bf16.msra.mxu0 0
        %825 = vmatprep.subr.bf16.mxu0 0
        %826 = vmatpush1.bf16.msra.mxu0 0
        %827 = vmatprep.subr.bf16.mxu0 0
        %828 = vmatpush1.bf16.msra.mxu0 0
        %829 = vmatprep.subr.bf16.mxu0 0
        %830 = vmatpush1.bf16.msra.mxu0 %v813
        %831 = vmatprep.subr.bf16.mxu0 0
        %832 = vmatpush2.bf16.msra.mxu0 0
        %833 = vmatprep.subr.bf16.mxu0 0
        %834 = vmatpush2.bf16.msra.mxu0 0
        %835 = vmatprep.subr.bf16.mxu0 0
        %836 = vmatpush2.bf16.msra.mxu0 0
        %837 = vmatprep.subr.bf16.mxu0 0
        %838 = vmatpush2.bf16.msra.mxu0 0
        %839 = vmatprep.subr.bf16.mxu0 0
        %840 = vmatpush2.bf16.msra.mxu0 0
        %841 = vmatprep.subr.bf16.mxu0 0
        %842 = vmatpush2.bf16.msra.mxu0 0
        %843 = vmatprep.subr.bf16.mxu0 0
        %844 = vmatpush2.bf16.msra.mxu0 0
        %845 = vmatprep.subr.bf16.mxu0 0
        %846 = vmatpush2.bf16.msra.mxu0 0
        %847 = vmatprep.mubr.bf16.mxu0 0
        %848 = vmatmul.mubr.bf16.gmra.mxu0 %v764
        %v849 = vpop.f32.mrf.mxu0
        %v850 = vadd.f32 0.0, %v849
        %v851 = vpop.f32.mrf.mxu0
        %v852 = vpop.f32.mrf.mxu0
        %v853 = vadd.f32 0.0, %v852
        %v854 = vpop.f32.mrf.mxu0
        %855 = vmatprep.mubr.bf16.mxu0 0
        %856 = vmatmul.mubr.bf16.gmra.mxu0 %v767
        %v857 = vpop.f32.mrf.mxu0
        %v858 = vadd.f32 0.0, %v857
        %v859 = vpop.f32.mrf.mxu0
        %v860 = vpop.f32.mrf.mxu0
        %v861 = vadd.f32 0.0, %v860
        %v862 = vpop.f32.mrf.mxu0
        %863 = vmatprep.mubr.bf16.mxu0 0
        %864 = vmatmul.mubr.bf16.gmra.mxu0 %v770
        %v865 = vpop.f32.mrf.mxu0
        %v866 = vadd.f32 0.0, %v865
        %v867 = vpop.f32.mrf.mxu0
        %v868 = vpop.f32.mrf.mxu0
        %v869 = vadd.f32 0.0, %v868
        %v870 = vpop.f32.mrf.mxu0
        %871 = vmatprep.mubr.bf16.mxu0 0
        %872 = vmatmul.mubr.bf16.gmra.mxu0 %v773
        %v873 = vpop.f32.mrf.mxu0
        %v874 = vadd.f32 0.0, %v873
        %v875 = vpop.f32.mrf.mxu0
        %v876 = vpop.f32.mrf.mxu0
        %v877 = vadd.f32 0.0, %v876
        %v878 = vpop.f32.mrf.mxu0
        %879 = vmatprep.mubr.bf16.mxu0 0
        %880 = vmatmul.mubr.bf16.gmra.mxu0 %v776
        %v881 = vpop.f32.mrf.mxu0
        %v882 = vadd.f32 0.0, %v881
        %v883 = vpop.f32.mrf.mxu0
        %v884 = vpop.f32.mrf.mxu0
        %v885 = vadd.f32 0.0, %v884
        %v886 = vpop.f32.mrf.mxu0
        %887 = vmatprep.mubr.bf16.mxu0 0
        %888 = vmatmul.mubr.bf16.gmra.mxu0 %v779
        %v889 = vpop.f32.mrf.mxu0
        %v890 = vadd.f32 0.0, %v889
        %v891 = vpop.f32.mrf.mxu0
        %v892 = vpop.f32.mrf.mxu0
        %v893 = vadd.f32 0.0, %v892
        %v894 = vpop.f32.mrf.mxu0
        %895 = vmatprep.mubr.bf16.mxu0 0
        %896 = vmatmul.mubr.bf16.gmra.mxu0 %v782
        %v897 = vpop.f32.mrf.mxu0
        %v898 = vadd.f32 0.0, %v897
        %v899 = vpop.f32.mrf.mxu0
        %v900 = vpop.f32.mrf.mxu0
        %v901 = vadd.f32 0.0, %v900
        %v902 = vpop.f32.mrf.mxu0
        %903 = vmatprep.mubr.bf16.mxu0 0
        %904 = vmatmul.mubr.bf16.gmra.mxu0 %v785
        %v905 = vpop.f32.mrf.mxu0
        %v906 = vadd.f32 0.0, %v905
        %v907 = vpop.f32.mrf.mxu0
        %v908 = vpop.f32.mrf.mxu0
        %v909 = vadd.f32 0.0, %v908
        %v910 = vpop.f32.mrf.mxu0
        %911 = vmatprep.mubr.bf16.mxu0 0
        %912 = vmatmul.mubr.bf16.gmra.mxu0 %v788
        %v913 = vpop.f32.mrf.mxu0
        %v914 = vadd.f32 0.0, %v913
        %v915 = vpop.f32.mrf.mxu0
        %v916 = vpop.f32.mrf.mxu0
        %v917 = vadd.f32 0.0, %v916
        %v918 = vpop.f32.mrf.mxu0
        %919 = vmatprep.mubr.bf16.mxu0 0
        %920 = vmatmul.mubr.bf16.gmra.mxu0 %v791
        %v921 = vpop.f32.mrf.mxu0
        %v922 = vadd.f32 0.0, %v921
        %v923 = vpop.f32.mrf.mxu0
        %v924 = vpop.f32.mrf.mxu0
        %v925 = vadd.f32 0.0, %v924
        %v926 = vpop.f32.mrf.mxu0
        %927 = vmatprep.mubr.bf16.mxu0 0
        %928 = vmatmul.mubr.bf16.gmra.mxu0 %v794
        %v929 = vpop.f32.mrf.mxu0
        %v930 = vadd.f32 0.0, %v929
        %v931 = vpop.f32.mrf.mxu0
        %v932 = vpop.f32.mrf.mxu0
        %v933 = vadd.f32 0.0, %v932
        %v934 = vpop.f32.mrf.mxu0
        %935 = vmatprep.mubr.bf16.mxu0 0
        %936 = vmatmul.mubr.bf16.gmra.mxu0 %v797
        %v937 = vpop.f32.mrf.mxu0
        %v938 = vadd.f32 0.0, %v937
        %v939 = vpop.f32.mrf.mxu0
        %v940 = vpop.f32.mrf.mxu0
        %v941 = vadd.f32 0.0, %v940
        %v942 = vpop.f32.mrf.mxu0
        %943 = vmatprep.mubr.bf16.mxu0 0
        %944 = vmatmul.mubr.bf16.gmra.mxu0 %v800
        %v945 = vpop.f32.mrf.mxu0
        %v946 = vadd.f32 0.0, %v945
        %v947 = vpop.f32.mrf.mxu0
        %v948 = vpop.f32.mrf.mxu0
        %v949 = vadd.f32 0.0, %v948
        %v950 = vpop.f32.mrf.mxu0
        %951 = vmatprep.mubr.bf16.mxu0 0
        %952 = vmatmul.mubr.bf16.gmra.mxu0 %v803
        %v953 = vpop.f32.mrf.mxu0
        %v954 = vadd.f32 0.0, %v953
        %v955 = vpop.f32.mrf.mxu0
        %v956 = vpop.f32.mrf.mxu0
        %v957 = vadd.f32 0.0, %v956
        %v958 = vpop.f32.mrf.mxu0
        %959 = vmatprep.mubr.bf16.mxu0 0
        %960 = vmatmul.mubr.bf16.gmra.mxu0 %v806
        %v961 = vpop.f32.mrf.mxu0
        %v962 = vadd.f32 0.0, %v961
        %v963 = vpop.f32.mrf.mxu0
        %v964 = vpop.f32.mrf.mxu0
        %v965 = vadd.f32 0.0, %v964
        %v966 = vpop.f32.mrf.mxu0
        %967 = vmatprep.mubr.bf16.mxu0 0
        %968 = vmatmul.mubr.bf16.gmra.mxu0 %v809
        %v969 = vpop.f32.mrf.mxu0
        %v970 = vadd.f32 0.0, %v969
        %v971 = vpop.f32.mrf.mxu0
        %v972 = vpop.f32.mrf.mxu0
        %v973 = vadd.f32 0.0, %v972
        %v974 = vpop.f32.mrf.mxu0
        %975 = vdwg.mxu0
        %v976 = vmax.f32 %v850, %v866
        %v977 = vmax.f32 %v853, %v869
        %v978 = vmax.f32 %v858, %v874
        %v979 = vmax.f32 %v861, %v877
        %v980 = vmax.f32 %v976, %v882
        %v981 = vmax.f32 %v977, %v885
        %v982 = vmax.f32 %v978, %v890
        %v983 = vmax.f32 %v979, %v893
        %v984 = vmax.f32 %v980, %v898
        %v985 = vmax.f32 %v981, %v901
        %v986 = vmax.f32 %v982, %v906
        %v987 = vmax.f32 %v983, %v909
        %v988 = vmax.f32 %v984, %v914
        %v989 = vmax.f32 %v985, %v917
        %v990 = vmax.f32 %v986, %v922
        %v991 = vmax.f32 %v987, %v925
        %v992 = vmax.f32 %v988, %v930
        %v993 = vmax.f32 %v989, %v933
        %v994 = vmax.f32 %v990, %v938
        %v995 = vmax.f32 %v991, %v941
        %v996 = vmax.f32 %v992, %v946
        %v997 = vmax.f32 %v993, %v949
        %v998 = vmax.f32 %v994, %v954
        %v999 = vmax.f32 %v995, %v957
        %v1000 = vmax.f32 %v996, %v962
        %v1001 = vmax.f32 %v997, %v965
        %v1002 = vmax.f32 %v998, %v970
        %v1003 = vmax.f32 %v999, %v973
        %v1004 = vmax.f32 %v1000, %v1001
        %v1005 = vmax.f32 %v1002, %v1003
        %v1006 = vmax.f32 %v1004, %v1005
        %v1007 = vrot.slane %v1006, 4
        %v1008 = vmax.f32 %v1006, %v1007
        %v1009 = vrot.slane %v1008, 2
        %v1010 = vmax.f32 %v1008, %v1009
        %v1011 = vrot.slane %v1010, 1
        %v1012 = vmax.f32 %v1010, %v1011
        %v1013 = vsub.f32 -inf, %v1012
        %v1014 = vmul.f32 %v1013, 1.442695
        %v1015 = vpow.pop %v1014
        %v1016 = vsub.f32 %v850, %v1012
        %v1017 = vsub.f32 %v853, %v1012
        %v1018 = vsub.f32 %v858, %v1012
        %v1019 = vsub.f32 %v861, %v1012
        %v1020 = vsub.f32 %v866, %v1012
        %v1021 = vsub.f32 %v869, %v1012
        %v1022 = vsub.f32 %v874, %v1012
        %v1023 = vsub.f32 %v877, %v1012
        %v1024 = vsub.f32 %v882, %v1012
        %v1025 = vsub.f32 %v885, %v1012
        %v1026 = vsub.f32 %v890, %v1012
        %v1027 = vsub.f32 %v893, %v1012
        %v1028 = vsub.f32 %v898, %v1012
        %v1029 = vsub.f32 %v901, %v1012
        %v1030 = vsub.f32 %v906, %v1012
        %v1031 = vsub.f32 %v909, %v1012
        %v1032 = vsub.f32 %v914, %v1012
        %v1033 = vsub.f32 %v917, %v1012
        %v1034 = vsub.f32 %v922, %v1012
        %v1035 = vsub.f32 %v925, %v1012
        %v1036 = vsub.f32 %v930, %v1012
        %v1037 = vsub.f32 %v933, %v1012
        %v1038 = vsub.f32 %v938, %v1012
        %v1039 = vsub.f32 %v941, %v1012
        %v1040 = vsub.f32 %v946, %v1012
        %v1041 = vsub.f32 %v949, %v1012
        %v1042 = vsub.f32 %v954, %v1012
        %v1043 = vsub.f32 %v957, %v1012
        %v1044 = vsub.f32 %v962, %v1012
        %v1045 = vsub.f32 %v965, %v1012
        %v1046 = vsub.f32 %v970, %v1012
        %v1047 = vsub.f32 %v973, %v1012
        %v1048 = vmul.f32 %v1016, 1.442695
        %v1049 = vpow.pop %v1048
        %v1050 = vmul.f32 %v1017, 1.442695
        %v1051 = vpow.pop %v1050
        %v1052 = vmul.f32 %v1018, 1.442695
        %v1053 = vpow.pop %v1052
        %v1054 = vmul.f32 %v1019, 1.442695
        %v1055 = vpow.pop %v1054
        %v1056 = vmul.f32 %v1020, 1.442695
        %v1057 = vpow.pop %v1056
        %v1058 = vmul.f32 %v1021, 1.442695
        %v1059 = vpow.pop %v1058
        %v1060 = vmul.f32 %v1022, 1.442695
        %v1061 = vpow.pop %v1060
        %v1062 = vmul.f32 %v1023, 1.442695
        %v1063 = vpow.pop %v1062
        %v1064 = vmul.f32 %v1024, 1.442695
        %v1065 = vpow.pop %v1064
        %v1066 = vmul.f32 %v1025, 1.442695
        %v1067 = vpow.pop %v1066
        %v1068 = vmul.f32 %v1026, 1.442695
        %v1069 = vpow.pop %v1068
        %v1070 = vmul.f32 %v1027, 1.442695
        %v1071 = vpow.pop %v1070
        %v1072 = vmul.f32 %v1028, 1.442695
        %v1073 = vpow.pop %v1072
        %v1074 = vmul.f32 %v1029, 1.442695
        %v1075 = vpow.pop %v1074
        %v1076 = vmul.f32 %v1030, 1.442695
        %v1077 = vpow.pop %v1076
        %v1078 = vmul.f32 %v1031, 1.442695
        %v1079 = vpow.pop %v1078
        %v1080 = vmul.f32 %v1032, 1.442695
        %v1081 = vpow.pop %v1080
        %v1082 = vmul.f32 %v1033, 1.442695
        %v1083 = vpow.pop %v1082
        %v1084 = vmul.f32 %v1034, 1.442695
        %v1085 = vpow.pop %v1084
        %v1086 = vmul.f32 %v1035, 1.442695
        %v1087 = vpow.pop %v1086
        %v1088 = vmul.f32 %v1036, 1.442695
        %v1089 = vpow.pop %v1088
        %v1090 = vmul.f32 %v1037, 1.442695
        %v1091 = vpow.pop %v1090
        %v1092 = vmul.f32 %v1038, 1.442695
        %v1093 = vpow.pop %v1092
        %v1094 = vmul.f32 %v1039, 1.442695
        %v1095 = vpow.pop %v1094
        %v1096 = vmul.f32 %v1040, 1.442695
        %v1097 = vpow.pop %v1096
        %v1098 = vmul.f32 %v1041, 1.442695
        %v1099 = vpow.pop %v1098
        %v1100 = vmul.f32 %v1042, 1.442695
        %v1101 = vpow.pop %v1100
        %v1102 = vmul.f32 %v1043, 1.442695
        %v1103 = vpow.pop %v1102
        %v1104 = vmul.f32 %v1044, 1.442695
        %v1105 = vpow.pop %v1104
        %v1106 = vmul.f32 %v1045, 1.442695
        %v1107 = vpow.pop %v1106
        %v1108 = vmul.f32 %v1046, 1.442695
        %v1109 = vpow.pop %v1108
        %v1110 = vmul.f32 %v1047, 1.442695
        %v1111 = vpow.pop %v1110
        %v1112 = vmul.f32 %v1015, 0.0
        %v1113 = vadd.f32 %v1049, %v1051
        %v1114 = vadd.f32 %v1113, %v1053
        %v1115 = vadd.f32 %v1114, %v1055
        %v1116 = vadd.f32 %v1115, %v1057
        %v1117 = vadd.f32 %v1116, %v1059
        %v1118 = vadd.f32 %v1117, %v1061
        %v1119 = vadd.f32 %v1118, %v1063
        %v1120 = vadd.f32 %v1119, %v1065
        %v1121 = vadd.f32 %v1120, %v1067
        %v1122 = vadd.f32 %v1121, %v1069
        %v1123 = vadd.f32 %v1122, %v1071
        %v1124 = vadd.f32 %v1123, %v1073
        %v1125 = vadd.f32 %v1124, %v1075
        %v1126 = vadd.f32 %v1125, %v1077
        %v1127 = vadd.f32 %v1126, %v1079
        %v1128 = vadd.f32 %v1127, %v1081
        %v1129 = vadd.f32 %v1128, %v1083
        %v1130 = vadd.f32 %v1129, %v1085
        %v1131 = vadd.f32 %v1130, %v1087
        %v1132 = vadd.f32 %v1131, %v1089
        %v1133 = vadd.f32 %v1132, %v1091
        %v1134 = vadd.f32 %v1133, %v1093
        %v1135 = vadd.f32 %v1134, %v1095
        %v1136 = vadd.f32 %v1135, %v1097
        %v1137 = vadd.f32 %v1136, %v1099
        %v1138 = vadd.f32 %v1137, %v1101
        %v1139 = vadd.f32 %v1138, %v1103
        %v1140 = vadd.f32 %v1139, %v1105
        %v1141 = vadd.f32 %v1140, %v1107
        %v1142 = vadd.f32 %v1141, %v1109
        %v1143 = vadd.f32 %v1142, %v1111
        %v1144 = vrot.slane %v1143, 4
        %v1145 = vadd.f32 %v1143, %v1144
        %v1146 = vrot.slane %v1145, 2
        %v1147 = vadd.f32 %v1145, %v1146
        %v1148 = vrot.slane %v1147, 1
        %v1149 = vadd.f32 %v1147, %v1148
        %v1150 = vadd.f32 %v1112, %v1149
        %v1151 = vld [vmem:[#allocation4] sm:$0xff]
        %v1152 = vld [vmem:[#allocation4 + $0x8] sm:$0xff]
        %v1153 = vpack.c.bf16 %v1051, %v1049
        %v1154 = vpack.c.bf16 %v1055, %v1053
        %v1155 = vpack.c.bf16 %v1059, %v1057
        %v1156 = vpack.c.bf16 %v1063, %v1061
        %v1157 = vpack.c.bf16 %v1067, %v1065
        %v1158 = vpack.c.bf16 %v1071, %v1069
        %v1159 = vpack.c.bf16 %v1075, %v1073
        %v1160 = vpack.c.bf16 %v1079, %v1077
        %v1161 = vpack.c.bf16 %v1083, %v1081
        %v1162 = vpack.c.bf16 %v1087, %v1085
        %v1163 = vpack.c.bf16 %v1091, %v1089
        %v1164 = vpack.c.bf16 %v1095, %v1093
        %v1165 = vpack.c.bf16 %v1099, %v1097
        %v1166 = vpack.c.bf16 %v1103, %v1101
        %v1167 = vpack.c.bf16 %v1107, %v1105
        %v1168 = vpack.c.bf16 %v1111, %v1109
        %v1171 = vunpack.c.l.b16 %v1151
        %v1172 = vunpack.c.h.b16 %v1151
        %v1173 = vunpack.c.l.b16 %v1152
        %v1174 = vunpack.c.h.b16 %v1152
        %v1175 = vpack.c.b16 %v1173, %v1171
        %v1176 = vpack.c.b16 %v1174, %v1172
        %1179 = vmatprep.subr.bf16.mxu0 0
        %1180 = vmatpush1.bf16.msra.mxu0 %v1160
        %1181 = vmatprep.subr.bf16.mxu0 0
        %1182 = vmatpush1.bf16.msra.mxu0 %v1159
        %1183 = vmatprep.subr.bf16.mxu0 0
        %1184 = vmatpush1.bf16.msra.mxu0 %v1158
        %1185 = vmatprep.subr.bf16.mxu0 0
        %1186 = vmatpush1.bf16.msra.mxu0 %v1157
        %1187 = vmatprep.subr.bf16.mxu0 0
        %1188 = vmatpush1.bf16.msra.mxu0 %v1156
        %1189 = vmatprep.subr.bf16.mxu0 0
        %1190 = vmatpush1.bf16.msra.mxu0 %v1155
        %1191 = vmatprep.subr.bf16.mxu0 0
        %1192 = vmatpush1.bf16.msra.mxu0 %v1154
        %1193 = vmatprep.subr.bf16.mxu0 0
        %1194 = vmatpush1.bf16.msra.mxu0 %v1153
        %1195 = vmatprep.subr.bf16.mxu0 0
        %1196 = vmatpush2.bf16.msra.mxu0 %v1168
        %1197 = vmatprep.subr.bf16.mxu0 0
        %1198 = vmatpush2.bf16.msra.mxu0 %v1167
        %1199 = vmatprep.subr.bf16.mxu0 0
        %1200 = vmatpush2.bf16.msra.mxu0 %v1166
        %1201 = vmatprep.subr.bf16.mxu0 0
        %1202 = vmatpush2.bf16.msra.mxu0 %v1165
        %1203 = vmatprep.subr.bf16.mxu0 0
        %1204 = vmatpush2.bf16.msra.mxu0 %v1164
        %1205 = vmatprep.subr.bf16.mxu0 0
        %1206 = vmatpush2.bf16.msra.mxu0 %v1163
        %1207 = vmatprep.subr.bf16.mxu0 0
        %1208 = vmatpush2.bf16.msra.mxu0 %v1162
        %1209 = vmatprep.subr.bf16.mxu0 0
        %1210 = vmatpush2.bf16.msra.mxu0 %v1161
        %1211 = vmatprep.mubr.bf16.mxu0 %v1176
        %1212 = vmatmul.mubr.bf16.gmra.mxu0 %v1175
        %v1213 = vpop.f32.mrf.mxu0
        %v1214 = vadd.f32 0.0, %v1213
        %v1215 = vpop.f32.mrf.mxu0
        %v1216 = vpop.f32.mrf.mxu0
        %v1217 = vadd.f32 0.0, %v1216
        %v1218 = vpop.f32.mrf.mxu0
        %1219 = vdwg.mxu0
        %v1220 = vadd.f32 %v1112, %v1214
        %v1221 = vadd.f32 %v1112, %v1217
        %v1222 = vrcp.pop %v1150
        %v1223 = vmul.f32 %v1220, %v1222
        %v1224 = vmul.f32 %v1221, %v1222
        %s1225 = sld [smem:[#allocation5]]
        %v1226 = vstv %s1225
        %v1227 = vmul.f32 %v1226, %v1223
        %v1228 = vmul.f32 %v1226, %v1224
        %v1229 = vld [vmem:[%s244] sm:$0xff]
        %v1230 = vld [vmem:[%s244 + $0x8] sm:$0xff]
        %v1231 = vadd.f32 %v1227, %v1229
        %v1232 = vadd.f32 %v1228, %v1230
        %1233 = vst [vmem:[%s275] sm:$0xff] %v1231
        %1234 = vst [vmem:[%s275 + $0x8] sm:$0xff] %v1232
        %s1235 = sand.u32 %s162, 1
        %s1236 = scalar_lea.sflag [#allocation8], %s1235
        %s1237 = sand.u32 %s162, 1
        %s1238 = smul.addr %s1237, 16
        %s1239 = scalar_lea.vmem [#allocation9], %s1238
        // Predicated region
        $region49: #{tpu_custom_call.1} parent=39 // pred_check
          %p1240 = pneg %p172
        $region50: #{tpu_custom_call.1} parent=39 // pred_check_branch
          %1242 = sbr.rel (%p1240) target = $region52
        $region51: #{tpu_custom_call.1} parent=39 // pred_region
          %s1244 = ssub.s32 256, 256
          %1245 = vsyncadd %s1236, %s1244
          %s1246 = smul.addr %s27, 4
          %s1247 = sadd.s32 %s28, %s1246
          %s1248 = smul.addr %s1247, 128
          %s1249 = scalar_lea.hbm %s5, %s1248
          %s1250 = sshll.u32 %s1239, 4
          %s1251 = int_to_ptr.vmem [resolvable:$true] %s1250
          %1256 = dma.vmem_to_hbm [thread:$0]  %s1251, 256, %s1249, %s1236, 128, 256, 8
        $region52: #{tpu_custom_call.1} parent=39 // pred_fallthru
          _
      $region40: #{tpu_custom_call.1} parent=5 // pred_fallthru
        _
      %p1257 = scmp.le.s32.totalorder 2, %s18
      // Predicated region
      $region53: #{tpu_custom_call.1} parent=5 // pred_check
        %p1258 = pneg %p1257
      $region54: #{tpu_custom_call.1} parent=5 // pred_check_branch
        %1260 = sbr.rel (%p1258) target = $region56
      $region55: #{tpu_custom_call.1} parent=5 // pred_region
        %s1261 = ssub.s32 %s18, 2
        // Predicated region
        $region57: #{tpu_custom_call.1} parent=55 // pred_check
          %p1262 = pneg %p178
        $region58: #{tpu_custom_call.1} parent=55 // pred_check_branch
          %1264 = sbr.rel (%p1262) target = $region60
        $region59: #{tpu_custom_call.1} parent=55 // pred_region
          %s1265 = sand.u32 %s163, 1
          %s1266 = scalar_lea.sflag [#allocation8], %s1265
          %s1267 = sand.u32 %s163, 1
          %s1268 = smul.addr %s1267, 16
          %s1269 = scalar_lea.vmem [#allocation9], %s1268
          %1270 = dma.done %s1266, 256
        $region60: #{tpu_custom_call.1} parent=55 // pred_fallthru
          _
      $region56: #{tpu_custom_call.1} parent=5 // pred_fallthru
        _
    $region6: #{tpu_custom_call.1} parent=1 // loop_footer
      %s22 = sadd.s32 1, %s18
    $region7: #{tpu_custom_call.1} parent=1 // loop_footer_branch
      %17 = sbr.rel target = $region3
    $region8: #{tpu_custom_call.1} parent=1 // loop_exit
      _
    %1271 = vsyncpa [#allocation7], 1
    %s1272 = scalar_lea.sflag [#allocation7], 1
    %1273 = vsyncpa %s1272, 1
    %1274 = vsyncpa [#allocation8], 1
    %s1275 = scalar_lea.sflag [#allocation8], 1
    %1276 = vsyncpa %s1275, 1

</llo_original>
